<compile_context>
chip_gen: v7x
topology: tpu7x:2x2x1
jax: 0.10.0
libtpu: 0.0.40
codegen_flags: <defaults>
</compile_context>

<pallas_src>
import functools

import jax
import jax.numpy as jnp
from jax import lax
from jax.experimental import pallas as pl
from jax.experimental.pallas import tpu as pltpu


LANE = 128                 # lane-dense output-channel padding
DEFAULT_TILE_ROWS = 1024   # target output rows (toh*ow) per grid step
PALLAS_MIN_ROWS = 128      # below this many output rows/image -> lax.conv fallback
_EPS = 1e-5
_SLOPE = 0.2


def _round_up(x, m):
    return ((x + m - 1) // m) * m


def _vmem_limit_bytes():
    """Scoped-VMEM request sized from the chip (fallback = safe 32 MiB default)."""
    try:
        cap = pltpu.get_tpu_info().vmem_capacity_bytes
        return int(min(cap * 3 // 4, 96 * 1024 * 1024))
    except Exception:  # pragma: no cover - query not available
        return 32 * 1024 * 1024


@functools.lru_cache(maxsize=None)
def _single_buffer_ok():
    """Probe once whether pl.Buffered(1) (single-buffered constant blocks) lowers, runs
    and returns correct data on this jax/libtpu; fall back to default buffering if not."""
    try:
        def k(x_ref, o_ref):
            o_ref[...] = x_ref[...] + 1.0

        x = jnp.zeros((4, 8, 128), jnp.float32)
        out = pl.pallas_call(
            k,
            grid=(2, 2),
            in_specs=[pl.BlockSpec((4, 8, 128), lambda i, j: (0, 0, 0),
                                   pipeline_mode=pl.Buffered(1))],
            out_specs=pl.BlockSpec((4, 8, 128), lambda i, j: (0, 0, 0)),
            out_shape=jax.ShapeDtypeStruct((4, 8, 128), jnp.float32),
        )(x)
        out = jax.block_until_ready(out)
        return bool(jnp.all(out == x + 1.0))
    except Exception:
        return False


def _const_spec(shape, index_map):
    """BlockSpec for a block whose contents never change across the grid: single-buffer
    it when supported (halves its VMEM footprint, e.g. 8 MiB for a 512x512 4x4 weight)."""
    if _single_buffer_ok():
        return pl.BlockSpec(shape, index_map, pipeline_mode=pl.Buffered(1))
    return pl.BlockSpec(shape, index_map)


def _choose_toh(oh, ow, target_rows, row_bytes, budget):
    """Largest divisor d of oh such that a d*ow-row tile fits the row target and the VMEM
    budget, preferring sublane-aligned (rows % 8 == 0) tiles."""
    best = 1
    for d in range(1, oh + 1):
        if oh % d:
            continue
        rows = d * ow
        if rows * row_bytes > budget or rows > target_rows:
            continue
        if d == oh or rows % 8 == 0:
            best = d
    return best


# ----------------------------------------------------------------------------
# Kernel 1a: packed (small-K) conv — one dense MXU matmul per tile (+ LeakyReLU)
# ----------------------------------------------------------------------------
def _packed_conv_kernel(x_ref, w_ref, o_ref, *, do_act, slope):
    toh, ow, kp = x_ref.shape
    lhs = x_ref[...].reshape(toh * ow, kp)              # contiguous, free
    acc = jnp.dot(lhs, w_ref[...], preferred_element_type=jnp.float32)
    if do_act:
        acc = jnp.where(acc > 0, acc, slope * acc)
    o_ref[...] = acc.reshape(o_ref.shape).astype(o_ref.dtype)


# ----------------------------------------------------------------------------
# Kernel 1b: fused im2col conv — kh*kw shifted MXU matmuls, value accumulation,
#            optional LeakyReLU or per-tile BN partial sums
# ----------------------------------------------------------------------------
def _tap_conv_kernel(*refs, n_in, taps, toh, ow, cin, has_stats, do_act, slope):
    in_refs = refs[:n_in]
    w_ref = refs[n_in]
    o_ref = refs[n_in + 1]

    h0 = pl.program_id(1) * toh

    acc = None
    for (in_idx, dk, w_row) in taps:
        # Full-width row window of a column-pre-sliced input: contiguous load, the
        # flatten below is free (no strided relayout copy per tap).
        lhs = in_refs[in_idx][pl.ds(h0 + dk, toh), :, :].reshape(toh * ow, cin)
        contrib = jnp.dot(lhs, w_ref[w_row], preferred_element_type=jnp.float32)
        acc = contrib if acc is None else acc + contrib

    if has_stats:
        psum_ref = refs[n_in + 2]
        psq_ref = refs[n_in + 3]
        psum_ref[...] = jnp.sum(acc, axis=0, keepdims=True)
        psq_ref[...] = jnp.sum(acc * acc, axis=0, keepdims=True)
    elif do_act:
        acc = jnp.where(acc > 0, acc, slope * acc)
    o_ref[...] = acc.reshape(o_ref.shape).astype(o_ref.dtype)


# ----------------------------------------------------------------------------
# Kernel 2: per-channel scale/shift (folded BN) + LeakyReLU
# ----------------------------------------------------------------------------
def _scale_shift_act_kernel(x_ref, s_ref, b_ref, o_ref, *, do_act, slope):
    y = x_ref[...].astype(jnp.float32) * s_ref[...] + b_ref[...]
    if do_act:
        y = jnp.where(y > 0, y, slope * y)
    o_ref[...] = y.astype(o_ref.dtype)


# ----------------------------------------------------------------------------
# One Conv2d(k=4, bias=False) [+ BN (train stats)] [+ LeakyReLU(0.2)] block
# ----------------------------------------------------------------------------
def conv_block(x, w_hwio, gamma, beta, *, stride, do_bn, do_act,
               eps=_EPS, slope=_SLOPE, tile_rows=DEFAULT_TILE_ROWS,
               out_dtype=jnp.bfloat16):
    n, h, w_sp, cin_x = x.shape
    kh, kw, cin_w, cout = w_hwio.shape
    assert cin_w <= cin_x
    pad = 1
    assert (h + 2 * pad - kh) % stride == 0 and (w_sp + 2 * pad - kw) % stride == 0

    oh = (h + 2 * pad - kh) // stride + 1
    ow = (w_sp + 2 * pad - kw) // stride + 1
    coutp = _round_up(cout, LANE)

    # Weight: zero-pad Cin up to the (channel-padded) activation, Cout to 128 lanes.
    w_p = jnp.zeros((kh, kw, cin_x, coutp), jnp.float32)
    w_p = w_p.at[:, :, :cin_w, :cout].set(w_hwio.astype(jnp.float32))

    xp = jnp.pad(x.astype(jnp.bfloat16),
                 ((0, 0), (pad, pad), (pad, pad), (0, 0)))

    vmem_limit = _vmem_limit_bytes()
    budget = int(vmem_limit * 0.8)
    raw_dtype = jnp.bfloat16 if do_bn else out_dtype
    out_item = jnp.dtype(raw_dtype).itemsize
    single_buf = 1 if _single_buffer_ok() else 2

    packed = (kh * kw * cin_x <= 256) and not do_bn

    if packed:
        # -------- layer-1 path: im2col along channels (small K) -> one GEMM --------
        K = kh * kw * cin_x
        cols = [xp[:, ki::stride, kj::stride, :][:, :oh, :ow, :]
                for ki in range(kh) for kj in range(kw)]
        x_packed = jnp.concatenate(cols, axis=-1)                  # (n, oh, ow, K)
        w_mat = w_p.reshape(K, coutp).astype(jnp.bfloat16)

        w_bytes = K * coutp * 2 * single_buf
        row_bytes = K * 2 * 2 + coutp * (out_item * 2 + 8)
        toh = _choose_toh(oh, ow, tile_rows, row_bytes,
                          max(budget - w_bytes, row_bytes * ow))
        t_steps = oh // toh
        grid = (n, t_steps)

        o_spec = pl.BlockSpec((None, toh, ow, coutp), lambda ni, ti: (ni, ti, 0, 0))
        in_specs = [pl.BlockSpec((None, toh, ow, K), lambda ni, ti: (ni, ti, 0, 0)),
                    _const_spec((K, coutp), lambda ni, ti: (0, 0))]
        operands = (x_packed, w_mat)
        kern = functools.partial(_packed_conv_kernel, do_act=do_act, slope=slope)
        out_shape = jax.ShapeDtypeStruct((n, oh, ow, coutp), raw_dtype)
        out_specs = o_spec
        bytes_accessed = (int(x_packed.size) * 2 + int(w_mat.size) * 2
                          + n * oh * ow * coutp * out_item)
    else:
        # -------- general path: fused im2col, full-width window per (phase, dj) ----
        cols_per_phase = kw // stride
        in_arrays, in_index = [], {}
        for pa in range(stride):
            for pb in range(stride):
                ph = xp[:, pa::stride, pb::stride, :]
                for dj in range(cols_per_phase):
                    in_index[(pa, pb, dj)] = len(in_arrays)
                    in_arrays.append(ph[:, :, dj:dj + ow, :])
        taps = tuple((in_index[(ki % stride, kj % stride, kj // stride)],
                      ki // stride, ki * kw + kj)
                     for ki in range(kh) for kj in range(kw))
        w_mat = w_p.reshape(kh * kw, cin_x, coutp).astype(jnp.bfloat16)

        fixed = (int(w_mat.size) * 2 * single_buf
                 + sum(int(a.size) // n * 2 for a in in_arrays) * 2)
        row_bytes = coutp * (out_item * 2 + 8) + cin_x * 2 * 2
        toh = _choose_toh(oh, ow, tile_rows, row_bytes,
                          max(budget - fixed, row_bytes * ow))
        t_steps = oh // toh
        grid = (n, t_steps)

        o_spec = pl.BlockSpec((None, toh, ow, coutp), lambda ni, ti: (ni, ti, 0, 0))
        in_specs = [pl.BlockSpec((None,) + a.shape[1:], lambda ni, ti: (ni, 0, 0, 0))
                    for a in in_arrays]
        in_specs.append(_const_spec(w_mat.shape, lambda ni, ti: (0, 0, 0)))
        operands = tuple(in_arrays) + (w_mat,)
        kern = functools.partial(
            _tap_conv_kernel, n_in=len(in_arrays), taps=taps, toh=toh, ow=ow,
            cin=cin_x, has_stats=do_bn, do_act=(do_act and not do_bn), slope=slope)
        if do_bn:
            out_shape = (jax.ShapeDtypeStruct((n, oh, ow, coutp), raw_dtype),
                         jax.ShapeDtypeStruct((n, t_steps, 1, coutp), jnp.float32),
                         jax.ShapeDtypeStruct((n, t_steps, 1, coutp), jnp.float32))
            stat_spec = pl.BlockSpec((None, None, 1, coutp),
                                     lambda ni, ti: (ni, ti, 0, 0))
            out_specs = (o_spec, stat_spec, stat_spec)
        else:
            out_shape = jax.ShapeDtypeStruct((n, oh, ow, coutp), raw_dtype)
            out_specs = o_spec
        bytes_accessed = (sum(int(a.size) for a in in_arrays) * 2
                          + int(w_mat.size) * 2
                          + n * oh * ow * coutp * out_item)

    flops = 2 * n * oh * ow * kh * kw * cin_x * coutp
    cost = pl.CostEstimate(flops=int(flops), transcendentals=0,
                           bytes_accessed=int(bytes_accessed))
    cparams = pltpu.CompilerParams(
        dimension_semantics=("parallel", "parallel"),
        vmem_limit_bytes=vmem_limit)

    conv_out = pl.pallas_call(
        kern, grid=grid, in_specs=in_specs, out_specs=out_specs,
        out_shape=out_shape, compiler_params=cparams, cost_estimate=cost,
    )(*operands)

    if not do_bn:
        return conv_out

    # ---- BatchNorm (training-mode batch stats): reduce per-tile partials in JAX ----
    raw, psum, psq = conv_out
    m_total = float(n * oh * ow)
    csum = jnp.sum(psum, axis=(0, 1, 2))
    csq = jnp.sum(psq, axis=(0, 1, 2))
    mean = csum / m_total
    var = jnp.maximum(csq / m_total - mean * mean, 0.0)
    gamma_p = jnp.zeros((coutp,), jnp.float32).at[:cout].set(gamma.astype(jnp.float32))
    beta_p = jnp.zeros((coutp,), jnp.float32).at[:cout].set(beta.astype(jnp.float32))
    inv_std = lax.rsqrt(var + eps)
    scale = (gamma_p * inv_std).reshape(1, coutp)
    shift = (beta_p - mean * gamma_p * inv_std).reshape(1, coutp)

    bn_kern = functools.partial(_scale_shift_act_kernel, do_act=do_act, slope=slope)
    o_spec = pl.BlockSpec((None, toh, ow, coutp), lambda ni, ti: (ni, ti, 0, 0))
    act = pl.pallas_call(
        bn_kern, grid=grid,
        in_specs=[o_spec,
                  _const_spec((1, coutp), lambda ni, ti: (0, 0)),
                  _const_spec((1, coutp), lambda ni, ti: (0, 0))],
        out_specs=o_spec,
        out_shape=jax.ShapeDtypeStruct((n, oh, ow, coutp), out_dtype),
        compiler_params=pltpu.CompilerParams(
            dimension_semantics=("parallel", "parallel"),
            vmem_limit_bytes=vmem_limit),
    )(raw, scale, shift)
    return act


# ----------------------------------------------------------------------------
# Tiny-tile fallback (per perf review): tail layers with a handful of output rows
# ----------------------------------------------------------------------------
def _jax_conv_block(h, layer, *, out_dtype, eps=_EPS, slope=_SLOPE):
    w = layer["w"].astype(jnp.float32)
    cin_w, cin_x = w.shape[2], h.shape[-1]
    if cin_x > cin_w:
        w = jnp.pad(w, ((0, 0), (0, 0), (0, cin_x - cin_w), (0, 0)))
    y = lax.conv_general_dilated(
        h.astype(jnp.bfloat16), w.astype(jnp.bfloat16),
        (layer["stride"],) * 2, [(1, 1), (1, 1)],
        dimension_numbers=("NHWC", "HWIO", "NHWC"),
        preferred_element_type=jnp.float32)
    if layer["do_bn"]:
        mean = jnp.mean(y, axis=(0, 1, 2), keepdims=True)
        var = jnp.mean(jnp.square(y - mean), axis=(0, 1, 2), keepdims=True)
        y = (y - mean) * lax.rsqrt(var + eps)
        y = y * layer["gamma"].reshape(1, 1, 1, -1) + layer["beta"].reshape(1, 1, 1, -1)
    if layer["do_act"]:
        y = jnp.where(y > 0, y, slope * y)
    return y.astype(out_dtype)


# ----------------------------------------------------------------------------
# Parameter init (mirrors Discriminator.__init__ structure, deterministic)
# ----------------------------------------------------------------------------
def init_discriminator_params(key, in_channel=6, num_blocks=5, hidden_channel=64):
    keys = list(jax.random.split(key, 64))
    kit = iter(keys)

    def conv_w(cin, cout):
        fan_in = 4 * 4 * cin
        return jax.random.normal(next(kit), (4, 4, cin, cout),
                                 jnp.float32) / jnp.sqrt(float(fan_in))

    def bn_params(c):
        g = 1.0 + 0.1 * jax.random.normal(next(kit), (c,), jnp.float32)
        b = 0.1 * jax.random.normal(next(kit), (c,), jnp.float32)
        return g, b

    layers = []
    layers.append(dict(w=conv_w(in_channel, hidden_channel),
                       gamma=jnp.ones((hidden_channel,), jnp.float32),
                       beta=jnp.zeros((hidden_channel,), jnp.float32),
                       stride=2, do_bn=False, do_act=True))
    nf_mult = 1
    n = 0
    for n in range(num_blocks - 3):
        nf_mult_prev = nf_mult
        nf_mult = min(2 ** n, 8)
        g, b = bn_params(hidden_channel * nf_mult)
        layers.append(dict(w=conv_w(hidden_channel * nf_mult_prev,
                                    hidden_channel * nf_mult),
                           gamma=g, beta=b, stride=2, do_bn=True, do_act=True))
    nf_mult_prev = nf_mult
    nf_mult = min(2 ** n, 8)
    g, b = bn_params(hidden_channel * nf_mult)
    layers.append(dict(w=conv_w(hidden_channel * nf_mult_prev,
                                hidden_channel * nf_mult),
                       gamma=g, beta=b, stride=1, do_bn=True, do_act=True))
    layers.append(dict(w=conv_w(hidden_channel * nf_mult, 1),
                       gamma=jnp.ones((1,), jnp.float32),
                       beta=jnp.zeros((1,), jnp.float32),
                       stride=1, do_bn=False, do_act=False))
    return layers


def discriminator_forward(layers, x, y, *, tile_rows=DEFAULT_TILE_ROWS,
                          pallas_min_rows=PALLAS_MIN_ROWS):
    # torch.cat([x, y], dim=1) in NCHW == channel concat (last axis) in NHWC.
    h = jnp.concatenate([x, y], axis=-1)
    cin = h.shape[-1]
    cin_p = _round_up(cin, 8)          # sublane-friendly K for the packed first layer
    if cin_p != cin:
        h = jnp.pad(h, ((0, 0), (0, 0), (0, 0), (0, cin_p - cin)))
    for i, layer in enumerate(layers):
        is_last = i == len(layers) - 1
        s = layer["stride"]
        oh = (h.shape[1] + 2 - 4) // s + 1
        ow = (h.shape[2] + 2 - 4) // s + 1
        out_dtype = jnp.float32 if is_last else jnp.bfloat16
        if oh * ow < pallas_min_rows:
            h = _jax_conv_block(h, layer, out_dtype=out_dtype)
        else:
            h = conv_block(h, layer["w"], layer["gamma"], layer["beta"],
                           stride=s, do_bn=layer["do_bn"], do_act=layer["do_act"],
                           tile_rows=tile_rows, out_dtype=out_dtype)
    # Strip any lane padding of the final 1-channel conv.
    return h[..., :layers[-1]["w"].shape[3]]


# ----------------------------------------------------------------------------
# Pure-JAX reference (same bf16-input / f32-accumulate conv convention)
# ----------------------------------------------------------------------------
def reference_forward(layers, x, y, eps=_EPS, slope=_SLOPE):
    h = jnp.concatenate([x, y], axis=-1)
    for layer in layers:
        h = lax.conv_general_dilated(
            h.astype(jnp.bfloat16), layer["w"].astype(jnp.bfloat16),
            (layer["stride"],) * 2, [(1, 1), (1, 1)],
            dimension_numbers=("NHWC", "HWIO", "NHWC"),
            preferred_element_type=jnp.float32)
        if layer["do_bn"]:
            mean = jnp.mean(h, axis=(0, 1, 2), keepdims=True)
            var = jnp.mean((h - mean) ** 2, axis=(0, 1, 2), keepdims=True)
            h = (h - mean) * lax.rsqrt(var + eps)
            h = h * layer["gamma"].reshape(1, 1, 1, -1) \
                + layer["beta"].reshape(1, 1, 1, -1)
        if layer["do_act"]:
            h = jnp.where(h > 0, h, slope * h)
    return h


if __name__ == "__main__":
    key = jax.random.PRNGKey(0)
    kx, ky, kp = jax.random.split(key, 3)

    # batch=2, x/y each 3 channels (concat -> in_channel=6), 32x32, hidden=16.
    N, H, W = 2, 32, 32
    x = jax.random.normal(kx, (N, H, W, 3), jnp.float32)   # NHWC
    y = jax.random.normal(ky, (N, H, W, 3), jnp.float32)   # NHWC

    layers = init_discriminator_params(kp, in_channel=6, num_blocks=5,
                                       hidden_channel=16)

    # Small tile target / low fallback threshold so the packed first-layer path,
    # the multi-tile grid and the parallel BN partial-sum path are all exercised.
    out = discriminator_forward(layers, x, y, tile_rows=32, pallas_min_rows=32)
    out = jax.block_until_ready(out)

    # Spatial trace: 32 -> 16 -> 8 -> 4 -> 3 -> 2 ; final channels = 1
    assert out.shape == (N, 2, 2, 1), out.shape

    ref = reference_forward(layers, x, y)
    err = float(jnp.max(jnp.abs(out - ref)))
    if not jnp.allclose(out, ref, rtol=2e-2, atol=2e-2):
        raise AssertionError(
            f"Pallas output does not match JAX reference (max abs err {err})")

    out_nchw = jnp.transpose(out, (0, 3, 1, 2))  # PyTorch NCHW (N,1,2,2)
    assert out_nchw.shape == (N, 1, 2, 2)

    print("KERNEL_OK")
</pallas_src>

<mosaic_0001>
module attributes {stable_mosaic.version = 11 : i64} {
  func.func @k(%arg0: i32, %arg1: i32, %arg2: memref<4x8x128xf32, #tpu.memory_space<vmem>>, %arg3: memref<4x8x128xf32, #tpu.memory_space<vmem>>) attributes {dimension_semantics = [#tpu.dimension_semantics<arbitrary>, #tpu.dimension_semantics<arbitrary>], iteration_bounds = array<i64: 2, 2>, scalar_prefetch = 0 : i64, scratch_operands = 0 : i64, tpu.core_type = #tpu.core_type<tc>, window_params = [{pipeline_mode = #tpu.pipeline_mode<synchronous>, transform_indices = @transform_0, window_bounds = array<i64: 4, 8, 128>}, {pipeline_mode = #tpu.pipeline_mode<synchronous>, transform_indices = @transform_1, window_bounds = array<i64: 4, 8, 128>}]} {
    %c0 = arith.constant 0 : index
    %c0_0 = arith.constant 0 : index
    %c0_1 = arith.constant 0 : index
    %0 = vector.load %arg2[%c0, %c0_0, %c0_1] : memref<4x8x128xf32, #tpu.memory_space<vmem>>, vector<4x8x128xf32>
    %cst = arith.constant 1.000000e+00 : f32
    %1 = vector.broadcast %cst : f32 to vector<4x8x128xf32>
    %2 = arith.addf %0, %1 : vector<4x8x128xf32>
    %c0_2 = arith.constant 0 : index
    %c0_3 = arith.constant 0 : index
    %c0_4 = arith.constant 0 : index
    %3 = vector.load %arg3[%c0_2, %c0_3, %c0_4] : memref<4x8x128xf32, #tpu.memory_space<vmem>>, vector<4x8x128xf32>
    tpu.vector_store %arg3[%c0_2, %c0_3, %c0_4], %2 {strides = array<i32>} : memref<4x8x128xf32, #tpu.memory_space<vmem>>, vector<4x8x128xf32>,
    return
  }
  func.func @transform_0(%arg0: i32, %arg1: i32) -> (i32, i32, i32) {
    %c0_i32 = arith.constant 0 : i32
    %c0_i32_0 = arith.constant 0 : i32
    %c0_i32_1 = arith.constant 0 : i32
    %c0_i32_2 = arith.constant 0 : i32
    return %c0_i32, %c0_i32_0, %c0_i32_1 : i32, i32, i32
  }
  func.func @transform_1(%arg0: i32, %arg1: i32) -> (i32, i32, i32) {
    %c0_i32 = arith.constant 0 : i32
    %c0_i32_0 = arith.constant 0 : i32
    %c0_i32_1 = arith.constant 0 : i32
    %c0_i32_2 = arith.constant 0 : i32
    return %c0_i32, %c0_i32_0, %c0_i32_1 : i32, i32, i32
  }
}

module attributes {stable_mosaic.version = 11 : i64} {
  func.func @_packed_conv_kernel(%arg0: i32, %arg1: i32, %arg2: memref<1x2x16x128xbf16, #tpu.memory_space<vmem>>, %arg3: memref<128x128xbf16, #tpu.memory_space<vmem>>, %arg4: memref<1x2x16x128xbf16, #tpu.memory_space<vmem>>) attributes {dimension_semantics = [#tpu.dimension_semantics<parallel>, #tpu.dimension_semantics<parallel>], iteration_bounds = array<i64: 2, 8>, scalar_prefetch = 0 : i64, scratch_operands = 0 : i64, tpu.core_type = #tpu.core_type<tc>, window_params = [{transform_indices = @transform_0, window_bounds = array<i64: 1, 2, 16, 128>}, {pipeline_mode = #tpu.pipeline_mode<synchronous>, transform_indices = @transform_1, window_bounds = array<i64: 128, 128>}, {transform_indices = @transform_2, window_bounds = array<i64: 1, 2, 16, 128>}]} {
    %c0 = arith.constant 0 : index
    %c0_0 = arith.constant 0 : index
    %c0_1 = arith.constant 0 : index
    %c0_2 = arith.constant 0 : index
    %0 = vector.load %arg2[%c0, %c0_0, %c0_1, %c0_2] : memref<1x2x16x128xbf16, #tpu.memory_space<vmem>>, vector<1x2x16x128xbf16>
    %1 = vector.shape_cast %0 : vector<1x2x16x128xbf16> to vector<2x16x128xbf16>
    %2 = vector.shape_cast %1 : vector<2x16x128xbf16> to vector<32x128xbf16>
    %c0_3 = arith.constant 0 : index
    %c0_4 = arith.constant 0 : index
    %3 = vector.load %arg3[%c0_3, %c0_4] : memref<128x128xbf16, #tpu.memory_space<vmem>>, vector<128x128xbf16>
    %cst = arith.constant dense<0.000000e+00> : vector<32x128xf32>
    %4 = tpu.matmul %2, %3, %cst {dimension_numbers = #tpu.dot_dimension_numbers<[1], [0], [0], [1], [0, 0, 1, 1], [], []>} : vector<32x128xbf16>, vector<128x128xbf16>, vector<32x128xf32> -> vector<32x128xf32>
    %cst_5 = arith.constant 0.000000e+00 : f32
    %5 = vector.broadcast %cst_5 : f32 to vector<32x128xf32>
    %6 = arith.cmpf ogt, %4, %5 : vector<32x128xf32>
    %cst_6 = arith.constant 2.000000e-01 : f32
    %7 = vector.broadcast %cst_6 : f32 to vector<32x128xf32>
    %8 = arith.mulf %7, %4 : vector<32x128xf32>
    %9 = arith.select %6, %4, %8 : vector<32x128xi1>, vector<32x128xf32>
    %10 = vector.shape_cast %9 : vector<32x128xf32> to vector<2x16x128xf32>
    %11 = arith.truncf %10 : vector<2x16x128xf32> to vector<2x16x128xbf16>
    %c0_7 = arith.constant 0 : index
    %c0_8 = arith.constant 0 : index
    %c0_9 = arith.constant 0 : index
    %c0_10 = arith.constant 0 : index
    %12 = vector.load %arg4[%c0_7, %c0_8, %c0_9, %c0_10] : memref<1x2x16x128xbf16, #tpu.memory_space<vmem>>, vector<1x2x16x128xbf16>
    %13 = vector.shape_cast %12 : vector<1x2x16x128xbf16> to vector<2x16x128xbf16>
    %14 = vector.shape_cast %11 : vector<2x16x128xbf16> to vector<1x2x16x128xbf16>
    tpu.vector_store %arg4[%c0_7, %c0_8, %c0_9, %c0_10], %14 {strides = array<i32>} : memref<1x2x16x128xbf16, #tpu.memory_space<vmem>>, vector<1x2x16x128xbf16>,
    return
  }
  func.func @transform_0(%arg0: i32, %arg1: i32) -> (i32, i32, i32, i32) {
    %c0_i32 = arith.constant 0 : i32
    %c0_i32_0 = arith.constant 0 : i32
    %c0_i32_1 = arith.constant 0 : i32
    return %arg0, %arg1, %c0_i32, %c0_i32_0 : i32, i32, i32, i32
  }
  func.func @transform_1(%arg0: i32, %arg1: i32) -> (i32, i32) {
    %c0_i32 = arith.constant 0 : i32
    %c0_i32_0 = arith.constant 0 : i32
    %c0_i32_1 = arith.constant 0 : i32
    return %c0_i32, %c0_i32_0 : i32, i32
  }
  func.func @transform_2(%arg0: i32, %arg1: i32) -> (i32, i32, i32, i32) {
    %c0_i32 = arith.constant 0 : i32
    %c0_i32_0 = arith.constant 0 : i32
    %c0_i32_1 = arith.constant 0 : i32
    return %arg0, %arg1, %c0_i32, %c0_i32_0 : i32, i32, i32, i32
  }
}

</mosaic_0001>

<llo_original>
// kernel: tpu_custom_call.1
$region0: #{tpu_custom_call.1}
  #allocation0 [shape = 'u32[]', space=smem, size = 0x4, offset = 0x4, fixed_abs, tag = 'smem constant byte address 0x4 - core index']
  #allocation1 [shape = 'u32[144,128]{1,0:T(1,128)}', space=vmem, size = 0x12000, scoped, tag = 'internal scratch']
  %s0 = inlined_call_operand.hbm [shape: f32[4,8,128], index: 0, kind: input, shape index: {}]
  %s1 = inlined_call_operand.hbm [shape: f32[4,8,128], index: 1, kind: output, shape index: {}]
  %s2 = sld [smem:[#allocation0]]
  $region41: #{tpu_custom_call.1} parent=0
    _
  %s4 = ssub.s32 1, %s2
  %s5 = scalar_select 0, %s4, %s2
  $region1: #{tpu_custom_call.1} parent=0
    #allocation2 [shape = 'u8[16384]{0}', space=vmem, size = 0x4000, scoped, tag = 'input window, operand 0, single buffered']
    #allocation3 [shape = 's32[2]{0}', space=sflag, size = 0x8, scoped, tag = 'scoped memory for tpu_custom_call.1']
    #allocation4 [shape = 's32[2]{0}', space=sflag, size = 0x8, scoped, tag = 'scoped memory for tpu_custom_call.1']
    #allocation5 [shape = 'u8[16384]{0}', space=vmem, size = 0x4000, scoped, tag = 'output window, operand 0, single buffered']
    %6 = vsyncpa [#allocation3], 0
    %7 = vsyncpa [#allocation4], 0
    loop: start=0, step=1, limit=6
    $region2: #{tpu_custom_call.1} parent=1 // loop_pre_header
      _
    $region3: #{tpu_custom_call.1} parent=1 // loop_header
      %s9 = sphi 0, %s13
      %p10 = scmp.ge.s32.totalorder %s9, 6
      %s16 = sphi 0, %s28
      %s17 = sphi 0, %s24
      %s18 = sphi 0, %s16
      %s19 = sphi 0, %s17
      %s20 = sphi 0, %s18
      %s21 = sphi 0, %s19
      %s29 = sphi 0, %s29
      %s31 = sphi 0, %s29
      %s32 = sphi 0, %s31
      %s46 = sphi 0, %s32
      %s50 = sphi 0, %s50
      %s52 = sphi 0, %s50
      %s53 = sphi 0, %s52
      %s67 = sphi 0, %s53
    $region4: #{tpu_custom_call.1} parent=1 // loop_header_branch
      %12 = sbr.rel (%p10) target = $region8
    $region5: #{tpu_custom_call.1} parent=1 // loop_body
      %s14 = ssub.s32 %s9, 1
      %s15 = ssub.s32 %s9, 2
      %s22 = sadd.s32 1, %s17
      %p23 = scmp.ge.s32.totalorder %s22, 2
      %s24 = scalar_select %p23, 0, %s22
      %s25 = sadd.s32 1, %s16
      %s26 = scalar_select %p23, %s25, %s16
      %p27 = scmp.ge.s32.totalorder %s26, 2
      %s28 = scalar_select %p27, 0, %s26
      %s30 = sadd.s32 %s29, 1
      %p33 = scmp.eq.s32.totalorder %s9, 3
      %p34 = scmp.ne.s32.totalorder %s29, %s31
      %p35 = scmp.eq.s32.totalorder %s9, 0
      %p36 = por %p34, %p35
      %p37 = scmp.ne.s32.totalorder %s29, %s31
      %p38 = scmp.eq.s32.totalorder %s14, 3
      %p39 = por %p37, %p38
      %p40 = scmp.ne.s32.totalorder %s31, %s32
      %p41 = scmp.eq.s32.totalorder %s14, 0
      %p42 = por %p40, %p41
      %p43 = scmp.ne.s32.totalorder %s31, %s32
      %p44 = scmp.eq.s32.totalorder %s15, 3
      %p45 = por %p43, %p44
      %p47 = scmp.ne.s32.totalorder %s32, %s46
      %p48 = scmp.eq.s32.totalorder %s15, 0
      %p49 = por %p47, %p48
      %s51 = sadd.s32 %s50, 1
      %p54 = scmp.eq.s32.totalorder %s9, 3
      %p55 = scmp.ne.s32.totalorder %s50, %s52
      %p56 = scmp.eq.s32.totalorder %s9, 0
      %p57 = por %p55, %p56
      %p58 = scmp.ne.s32.totalorder %s50, %s52
      %p59 = scmp.eq.s32.totalorder %s14, 3
      %p60 = por %p58, %p59
      %p61 = scmp.ne.s32.totalorder %s52, %s53
      %p62 = scmp.eq.s32.totalorder %s14, 0
      %p63 = por %p61, %p62
      %p64 = scmp.ne.s32.totalorder %s52, %s53
      %p65 = scmp.eq.s32.totalorder %s15, 3
      %p66 = por %p64, %p65
      %p68 = scmp.ne.s32.totalorder %s53, %s67
      %p69 = scmp.eq.s32.totalorder %s15, 0
      %p70 = por %p68, %p69
      %p71 = scmp.le.s32.totalorder 1, %s9
      %p72 = scmp.lt.s32.totalorder %s9, 5
      %p73 = pnand %p71, %p72
      %p74 = pneg %p73
      // Predicated region
      $region9: #{tpu_custom_call.1} parent=5 // pred_check
        _
      $region10: #{tpu_custom_call.1} parent=5 // pred_check_branch
        %76 = sbr.rel (%p73) target = $region12
      $region11: #{tpu_custom_call.1} parent=5 // pred_region
        %s77 = ssub.s32 %s9, 1
        // Predicated region
        $region13: #{tpu_custom_call.1} parent=11 // pred_check
          %p78 = pneg %p42
        $region14: #{tpu_custom_call.1} parent=11 // pred_check_branch
          %80 = sbr.rel (%p78) target = $region16
        $region15: #{tpu_custom_call.1} parent=11 // pred_region
          %s82 = ssub.s32 512, 512
          %83 = vsyncadd [#allocation3], %s82
          %s84 = sshll.u32 [#allocation2], 4
          %s85 = int_to_ptr.vmem [resolvable:$true] %s84
          %90 = dma.hbm_to_vmem [thread:$0]  %s0, 512, %s85, [#allocation3], 128, 128, 8
        $region16: #{tpu_custom_call.1} parent=11 // pred_fallthru
          _
      $region12: #{tpu_custom_call.1} parent=5 // pred_fallthru
        _
      %p91 = scmp.lt.s32.totalorder %s9, 4
      // Predicated region
      $region17: #{tpu_custom_call.1} parent=5 // pred_check
        %p92 = pneg %p91
      $region18: #{tpu_custom_call.1} parent=5 // pred_check_branch
        %94 = sbr.rel (%p92) target = $region20
      $region19: #{tpu_custom_call.1} parent=5 // pred_region
        _
      $region20: #{tpu_custom_call.1} parent=5 // pred_fallthru
        _
      %p95 = scmp.le.s32.totalorder 1, %s9
      %p96 = scmp.lt.s32.totalorder %s9, 5
      %p97 = pnand %p95, %p96
      %p98 = pneg %p97
      // Predicated region
      $region21: #{tpu_custom_call.1} parent=5 // pred_check
        _
      $region22: #{tpu_custom_call.1} parent=5 // pred_check_branch
        %100 = sbr.rel (%p97) target = $region24
      $region23: #{tpu_custom_call.1} parent=5 // pred_region
        %s101 = ssub.s32 %s9, 1
        // Predicated region
        $region25: #{tpu_custom_call.1} parent=23 // pred_check
          %p102 = pneg %p42
        $region26: #{tpu_custom_call.1} parent=23 // pred_check_branch
          %104 = sbr.rel (%p102) target = $region28
        $region27: #{tpu_custom_call.1} parent=23 // pred_region
          %105 = dma.done [#allocation3], 512
        $region28: #{tpu_custom_call.1} parent=23 // pred_fallthru
          _
        %p106 = pneg %p42
        %p107 = pneg %p39
        %p108 = pneg %p63
        %p109 = pneg %p60
        %v110 = vld [vmem:[#allocation2] sm:$0xff]
        %v111 = vld [vmem:[#allocation2 + $0x8] sm:$0xff]
        %v112 = vld [vmem:[#allocation2 + $0x10] sm:$0xff]
        %v113 = vld [vmem:[#allocation2 + $0x18] sm:$0xff]
        %v114 = vadd.f32 %v110, 1.0
        %v115 = vadd.f32 %v111, 1.0
        %v116 = vadd.f32 %v112, 1.0
        %v117 = vadd.f32 %v113, 1.0
        %118 = vst [vmem:[#allocation5] sm:$0xff] %v114
        %119 = vst [vmem:[#allocation5 + $0x8] sm:$0xff] %v115
        %120 = vst [vmem:[#allocation5 + $0x10] sm:$0xff] %v116
        %121 = vst [vmem:[#allocation5 + $0x18] sm:$0xff] %v117
        // Predicated region
        $region29: #{tpu_custom_call.1} parent=23 // pred_check
          %p122 = pneg %p60
        $region30: #{tpu_custom_call.1} parent=23 // pred_check_branch
          %124 = sbr.rel (%p122) target = $region32
        $region31: #{tpu_custom_call.1} parent=23 // pred_region
          %s126 = ssub.s32 512, 512
          %127 = vsyncadd [#allocation4], %s126
          %s128 = sshll.u32 [#allocation5], 4
          %s129 = int_to_ptr.vmem [resolvable:$true] %s128
          %134 = dma.vmem_to_hbm [thread:$0]  %s129, 512, %s1, [#allocation4], 128, 128, 8
        $region32: #{tpu_custom_call.1} parent=23 // pred_fallthru
          _
        // Predicated region
        $region33: #{tpu_custom_call.1} parent=23 // pred_check
          %p135 = pneg %p60
        $region34: #{tpu_custom_call.1} parent=23 // pred_check_branch
          %137 = sbr.rel (%p135) target = $region36
        $region35: #{tpu_custom_call.1} parent=23 // pred_region
          %138 = dma.done [#allocation4], 512
        $region36: #{tpu_custom_call.1} parent=23 // pred_fallthru
          _
      $region24: #{tpu_custom_call.1} parent=5 // pred_fallthru
        _
      %p139 = scmp.le.s32.totalorder 2, %s9
      // Predicated region
      $region37: #{tpu_custom_call.1} parent=5 // pred_check
        %p140 = pneg %p139
      $region38: #{tpu_custom_call.1} parent=5 // pred_check_branch
        %142 = sbr.rel (%p140) target = $region40
      $region39: #{tpu_custom_call.1} parent=5 // pred_region
        %s143 = ssub.s32 %s9, 2
      $region40: #{tpu_custom_call.1} parent=5 // pred_fallthru
        _
    $region6: #{tpu_custom_call.1} parent=1 // loop_footer
      %s13 = sadd.s32 1, %s9
    $region7: #{tpu_custom_call.1} parent=1 // loop_footer_branch
      %8 = sbr.rel target = $region3
    $region8: #{tpu_custom_call.1} parent=1 // loop_exit
      _
    %144 = vsyncpa [#allocation3], 1
    %s145 = scalar_lea.sflag [#allocation3], 1
    %146 = vsyncpa %s145, 1
    %147 = vsyncpa [#allocation4], 1
    %s148 = scalar_lea.sflag [#allocation4], 1
    %149 = vsyncpa %s148, 1

// kernel: tpu_custom_call.1
$region0: #{tpu_custom_call.1}
  #allocation0 [shape = 'u32[]', space=smem, size = 0x4, offset = 0x4, fixed_abs, tag = 'smem constant byte address 0x4 - core index']
  #allocation1 [shape = 'u32[144,128]{1,0:T(1,128)}', space=vmem, size = 0x12000, scoped, tag = 'internal scratch']
  %s0 = inlined_call_operand.hbm [shape: bf16[2,16,16,128], index: 0, kind: input, shape index: {}]
  %s1 = inlined_call_operand.hbm [shape: bf16[128,128], index: 1, kind: input, shape index: {}]
  %s2 = inlined_call_operand.hbm [shape: bf16[2,16,16,128], index: 2, kind: output, shape index: {}]
  %s3 = sld [smem:[#allocation0]]
  $region49: #{tpu_custom_call.1} parent=0
    _
  %s5 = ssub.s32 1, %s3
  %s6 = scalar_select 0, %s5, %s3
  $region1: #{tpu_custom_call.1} parent=0
    #allocation2 [shape = 'u8[16384]{0}', space=vmem, size = 0x4000, scoped, tag = 'input window, operand 0']
    #allocation3 [shape = 's32[2]{0}', space=sflag, size = 0x8, scoped, tag = 'scoped memory for tpu_custom_call.1']
    #allocation4 [shape = 's32[2]{0}', space=sflag, size = 0x8, scoped, tag = 'scoped memory for tpu_custom_call.1']
    #allocation5 [shape = 'u8[32768]{0}', space=vmem, size = 0x8000, scoped, tag = 'input window, operand 1, single buffered']
    #allocation6 [shape = 's32[1]{0}', space=sflag, size = 0x4, scoped, tag = 'scoped memory for tpu_custom_call.1']
    #allocation7 [shape = 'u8[16384]{0}', space=vmem, size = 0x4000, scoped, tag = 'output window, operand 0']
    %7 = vsyncpa [#allocation3], 0
    %s8 = scalar_lea.sflag [#allocation3], 1
    %9 = vsyncpa %s8, 0
    %10 = vsyncpa [#allocation6], 0
    %11 = vsyncpa [#allocation4], 0
    %s12 = scalar_lea.sflag [#allocation4], 1
    %13 = vsyncpa %s12, 0
    loop: start=0, step=1, limit=18
    $region2: #{tpu_custom_call.1} parent=1 // loop_pre_header
      _
    $region3: #{tpu_custom_call.1} parent=1 // loop_header
      %s15 = sphi 0, %s19
      %p16 = scmp.ge.s32.totalorder %s15, 18
      %s22 = sphi 0, %s34
      %s23 = sphi 0, %s30
      %s24 = sphi 0, %s22
      %s25 = sphi 0, %s23
      %s26 = sphi 0, %s24
      %s27 = sphi 0, %s25
      %s39 = sphi 0, %s41
      %s42 = sphi 0, %s39
      %s43 = sphi 0, %s42
      %s59 = sphi 0, %s43
      %s63 = sphi 0, %s63
      %s65 = sphi 0, %s63
      %s66 = sphi 0, %s65
      %s80 = sphi 0, %s66
      %s88 = sphi 0, %s90
      %s91 = sphi 0, %s88
      %s92 = sphi 0, %s91
      %s108 = sphi 0, %s92
    $region4: #{tpu_custom_call.1} parent=1 // loop_header_branch
      %18 = sbr.rel (%p16) target = $region8
    $region5: #{tpu_custom_call.1} parent=1 // loop_body
      %s20 = ssub.s32 %s15, 1
      %s21 = ssub.s32 %s15, 2
      %s28 = sadd.s32 1, %s23
      %p29 = scmp.ge.s32.totalorder %s28, 8
      %s30 = scalar_select %p29, 0, %s28
      %s31 = sadd.s32 1, %s22
      %s32 = scalar_select %p29, %s31, %s22
      %p33 = scmp.ge.s32.totalorder %s32, 2
      %s34 = scalar_select %p33, 0, %s32
      %s35 = ssub.s32 %s22, %s34
      %s36 = ssub.s32 %s23, %s30
      %s37 = sor.u32 %s35, %s36
      %p38 = scmp.eq.s32.totalorder %s37, 0
      %s40 = sadd.s32 %s39, 1
      %s41 = scalar_select %p38, %s39, %s40
      %p44 = pneg %p38
      %p45 = scmp.eq.s32.totalorder %s15, 15
      %p46 = por %p44, %p45
      %p47 = scmp.ne.s32.totalorder %s39, %s42
      %p48 = scmp.eq.s32.totalorder %s15, 0
      %p49 = por %p47, %p48
      %p50 = scmp.ne.s32.totalorder %s39, %s42
      %p51 = scmp.eq.s32.totalorder %s20, 15
      %p52 = por %p50, %p51
      %p53 = scmp.ne.s32.totalorder %s42, %s43
      %p54 = scmp.eq.s32.totalorder %s20, 0
      %p55 = por %p53, %p54
      %p56 = scmp.ne.s32.totalorder %s42, %s43
      %p57 = scmp.eq.s32.totalorder %s21, 15
      %p58 = por %p56, %p57
      %p60 = scmp.ne.s32.totalorder %s43, %s59
      %p61 = scmp.eq.s32.totalorder %s21, 0
      %p62 = por %p60, %p61
      %s64 = sadd.s32 %s63, 1
      %p67 = scmp.eq.s32.totalorder %s15, 15
      %p68 = scmp.ne.s32.totalorder %s63, %s65
      %p69 = scmp.eq.s32.totalorder %s15, 0
      %p70 = por %p68, %p69
      %p71 = scmp.ne.s32.totalorder %s63, %s65
      %p72 = scmp.eq.s32.totalorder %s20, 15
      %p73 = por %p71, %p72
      %p74 = scmp.ne.s32.totalorder %s65, %s66
      %p75 = scmp.eq.s32.totalorder %s20, 0
      %p76 = por %p74, %p75
      %p77 = scmp.ne.s32.totalorder %s65, %s66
      %p78 = scmp.eq.s32.totalorder %s21, 15
      %p79 = por %p77, %p78
      %p81 = scmp.ne.s32.totalorder %s66, %s80
      %p82 = scmp.eq.s32.totalorder %s21, 0
      %p83 = por %p81, %p82
      %s84 = ssub.s32 %s22, %s34
      %s85 = ssub.s32 %s23, %s30
      %s86 = sor.u32 %s84, %s85
      %p87 = scmp.eq.s32.totalorder %s86, 0
      %s89 = sadd.s32 %s88, 1
      %s90 = scalar_select %p87, %s88, %s89
      %p93 = pneg %p87
      %p94 = scmp.eq.s32.totalorder %s15, 15
      %p95 = por %p93, %p94
      %p96 = scmp.ne.s32.totalorder %s88, %s91
      %p97 = scmp.eq.s32.totalorder %s15, 0
      %p98 = por %p96, %p97
      %p99 = scmp.ne.s32.totalorder %s88, %s91
      %p100 = scmp.eq.s32.totalorder %s20, 15
      %p101 = por %p99, %p100
      %p102 = scmp.ne.s32.totalorder %s91, %s92
      %p103 = scmp.eq.s32.totalorder %s20, 0
      %p104 = por %p102, %p103
      %p105 = scmp.ne.s32.totalorder %s91, %s92
      %p106 = scmp.eq.s32.totalorder %s21, 15
      %p107 = por %p105, %p106
      %p109 = scmp.ne.s32.totalorder %s92, %s108
      %p110 = scmp.eq.s32.totalorder %s21, 0
      %p111 = por %p109, %p110
      %p112 = scmp.le.s32.totalorder 1, %s15
      %p113 = scmp.lt.s32.totalorder %s15, 17
      %p114 = pnand %p112, %p113
      %p115 = pneg %p114
      // Predicated region
      $region9: #{tpu_custom_call.1} parent=5 // pred_check
        _
      $region10: #{tpu_custom_call.1} parent=5 // pred_check_branch
        %117 = sbr.rel (%p114) target = $region12
      $region11: #{tpu_custom_call.1} parent=5 // pred_region
        %s118 = ssub.s32 %s15, 1
        // Predicated region
        $region13: #{tpu_custom_call.1} parent=11 // pred_check
          %p119 = pneg %p76
        $region14: #{tpu_custom_call.1} parent=11 // pred_check_branch
          %121 = sbr.rel (%p119) target = $region16
        $region15: #{tpu_custom_call.1} parent=11 // pred_region
          %s123 = ssub.s32 1024, 1024
          %124 = vsyncadd [#allocation6], %s123
          %s125 = sshll.u32 [#allocation5], 4
          %s126 = int_to_ptr.vmem [resolvable:$true] %s125
          %131 = dma.hbm_to_vmem [thread:$0]  %s1, 1024, %s126, [#allocation6], 64, 64, 4
        $region16: #{tpu_custom_call.1} parent=11 // pred_fallthru
          _
      $region12: #{tpu_custom_call.1} parent=5 // pred_fallthru
        _
      %p132 = scmp.lt.s32.totalorder %s15, 16
      // Predicated region
      $region17: #{tpu_custom_call.1} parent=5 // pred_check
        %p133 = pneg %p132
      $region18: #{tpu_custom_call.1} parent=5 // pred_check_branch
        %135 = sbr.rel (%p133) target = $region20
      $region19: #{tpu_custom_call.1} parent=5 // pred_region
        // Predicated region
        $region21: #{tpu_custom_call.1} parent=19 // pred_check
          %p136 = pneg %p49
        $region22: #{tpu_custom_call.1} parent=19 // pred_check_branch
          %138 = sbr.rel (%p136) target = $region24
        $region23: #{tpu_custom_call.1} parent=19 // pred_region
          %s139 = sand.u32 %s39, 1
          %s140 = scalar_lea.sflag [#allocation3], %s139
          %s141 = sand.u32 %s39, 1
          %s142 = smul.addr %s141, 16
          %s143 = scalar_lea.vmem [#allocation2], %s142
          %s144 = smul.u32 2, %s23
          %s146 = ssub.s32 256, 256
          %147 = vsyncadd %s140, %s146
          %s148 = smul.addr %s144, 2
          %s149 = smul.addr %s22, 32
          %s150 = sadd.s32 %s148, %s149
          %s151 = smul.addr %s150, 64
          %s152 = scalar_lea.hbm %s0, %s151
          %s153 = sshll.u32 %s143, 4
          %s154 = int_to_ptr.vmem [resolvable:$true] %s153
          %159 = dma.hbm_to_vmem [thread:$0]  %s152, 256, %s154, %s140, 64, 64, 4
        $region24: #{tpu_custom_call.1} parent=19 // pred_fallthru
          _
      $region20: #{tpu_custom_call.1} parent=5 // pred_fallthru
        _
      %p160 = scmp.le.s32.totalorder 1, %s15
      %p161 = scmp.lt.s32.totalorder %s15, 17
      %p162 = pnand %p160, %p161
      %p163 = pneg %p162
      // Predicated region
      $region25: #{tpu_custom_call.1} parent=5 // pred_check
        _
      $region26: #{tpu_custom_call.1} parent=5 // pred_check_branch
        %165 = sbr.rel (%p162) target = $region28
      $region27: #{tpu_custom_call.1} parent=5 // pred_region
        %s166 = ssub.s32 %s15, 1
        %s167 = sand.u32 %s42, 1
        %s168 = scalar_lea.sflag [#allocation3], %s167
        %s169 = sand.u32 %s42, 1
        %s170 = smul.addr %s169, 16
        %s171 = scalar_lea.vmem [#allocation2], %s170
        // Predicated region
        $region29: #{tpu_custom_call.1} parent=27 // pred_check
          %p172 = pneg %p55
        $region30: #{tpu_custom_call.1} parent=27 // pred_check_branch
          %174 = sbr.rel (%p172) target = $region32
        $region31: #{tpu_custom_call.1} parent=27 // pred_region
          %175 = dma.done %s168, 256
        $region32: #{tpu_custom_call.1} parent=27 // pred_fallthru
          _
        // Predicated region
        $region33: #{tpu_custom_call.1} parent=27 // pred_check
          %p176 = pneg %p76
        $region34: #{tpu_custom_call.1} parent=27 // pred_check_branch
          %178 = sbr.rel (%p176) target = $region36
        $region35: #{tpu_custom_call.1} parent=27 // pred_region
          %179 = dma.done [#allocation6], 1024
        $region36: #{tpu_custom_call.1} parent=27 // pred_fallthru
          _
        %s180 = sand.u32 %s42, 1
        %s181 = scalar_lea.sflag [#allocation3], %s180
        %s182 = sand.u32 %s42, 1
        %s183 = smul.addr %s182, 16
        %s184 = scalar_lea.vmem [#allocation2], %s183
        %p185 = pneg %p55
        %p186 = pneg %p52
        %p187 = pneg %p76
        %p188 = pneg %p73
        %p189 = pneg %p104
        %p190 = pneg %p101
        %s191 = sand.u32 %s91, 1
        %s192 = scalar_lea.sflag [#allocation4], %s191
        %s193 = sand.u32 %s91, 1
        %s194 = smul.addr %s193, 16
        %s195 = scalar_lea.vmem [#allocation7], %s194
        %s196 = smul.u32 2, %s25
        %s197 = smul.u32 2, %s25
        %v199 = vld [vmem:[%s171] sm:$0xf]
        %v200 = vld [vmem:[%s171 + $0x4] sm:$0xf]
        %v201 = vld [vmem:[%s171 + $0x8] sm:$0xf]
        %v202 = vld [vmem:[%s171 + $0xc] sm:$0xf]
        %v203 = vld [vmem:[#allocation5] sm:$0xf]
        %v204 = vld [vmem:[#allocation5 + $0x4] sm:$0xf]
        %v205 = vld [vmem:[#allocation5 + $0x8] sm:$0xf]
        %v206 = vld [vmem:[#allocation5 + $0xc] sm:$0xf]
        %v207 = vld [vmem:[#allocation5 + $0x10] sm:$0xf]
        %v208 = vld [vmem:[#allocation5 + $0x14] sm:$0xf]
        %v209 = vld [vmem:[#allocation5 + $0x18] sm:$0xf]
        %v210 = vld [vmem:[#allocation5 + $0x1c] sm:$0xf]
        %v211 = vld [vmem:[#allocation5 + $0x20] sm:$0xf]
        %v212 = vld [vmem:[#allocation5 + $0x24] sm:$0xf]
        %v213 = vld [vmem:[#allocation5 + $0x28] sm:$0xf]
        %v214 = vld [vmem:[#allocation5 + $0x2c] sm:$0xf]
        %v215 = vld [vmem:[#allocation5 + $0x30] sm:$0xf]
        %v216 = vld [vmem:[#allocation5 + $0x34] sm:$0xf]
        %v217 = vld [vmem:[#allocation5 + $0x38] sm:$0xf]
        %v218 = vld [vmem:[#allocation5 + $0x3c] sm:$0xf]
        %v223 = vunpack.c.l.b16 %v199
        %v224 = vunpack.c.l.b16 %v200
        %v225 = vunpack.c.l.b16 %v201
        %v226 = vunpack.c.l.b16 %v202
        %v227 = vpack.c.b16 %v224, %v223
        %v228 = vpack.c.b16 %v226, %v225
        %v247 = vunpack.c.l.b16 %v203
        %v248 = vunpack.c.l.b16 %v204
        %v249 = vunpack.c.l.b16 %v205
        %v250 = vunpack.c.l.b16 %v206
        %v251 = vunpack.c.l.b16 %v207
        %v252 = vunpack.c.l.b16 %v208
        %v253 = vunpack.c.l.b16 %v209
        %v254 = vunpack.c.l.b16 %v210
        %v255 = vunpack.c.l.b16 %v211
        %v256 = vunpack.c.l.b16 %v212
        %v257 = vunpack.c.l.b16 %v213
        %v258 = vunpack.c.l.b16 %v214
        %v259 = vunpack.c.l.b16 %v215
        %v260 = vunpack.c.l.b16 %v216
        %v261 = vunpack.c.l.b16 %v217
        %v262 = vunpack.c.l.b16 %v218
        %v263 = vpack.c.b16 %v248, %v247
        %v264 = vpack.c.b16 %v250, %v249
        %v265 = vpack.c.b16 %v252, %v251
        %v266 = vpack.c.b16 %v254, %v253
        %v267 = vpack.c.b16 %v256, %v255
        %v268 = vpack.c.b16 %v258, %v257
        %v269 = vpack.c.b16 %v260, %v259
        %v270 = vpack.c.b16 %v262, %v261
        %279 = vmatprep.subr.bf16.mxu0 0
        %280 = vmatpush1.bf16.msra.mxu0 %v263
        %281 = vmatprep.subr.bf16.mxu0 0
        %282 = vmatpush1.bf16.msra.mxu0 %v264
        %283 = vmatprep.subr.bf16.mxu0 0
        %284 = vmatpush1.bf16.msra.mxu0 %v265
        %285 = vmatprep.subr.bf16.mxu0 0
        %286 = vmatpush1.bf16.msra.mxu0 %v266
        %287 = vmatprep.subr.bf16.mxu0 0
        %288 = vmatpush1.bf16.msra.mxu0 %v267
        %289 = vmatprep.subr.bf16.mxu0 0
        %290 = vmatpush1.bf16.msra.mxu0 %v268
        %291 = vmatprep.subr.bf16.mxu0 0
        %292 = vmatpush1.bf16.msra.mxu0 %v269
        %293 = vmatprep.subr.bf16.mxu0 0
        %294 = vmatpush1.bf16.msra.mxu0 %v270
        %295 = vmatprep.subr.bf16.mxu0 0
        %296 = vmatpush1.bf16.msra.mxu0 0
        %297 = vmatprep.subr.bf16.mxu0 0
        %298 = vmatpush1.bf16.msra.mxu0 0
        %299 = vmatprep.subr.bf16.mxu0 0
        %300 = vmatpush1.bf16.msra.mxu0 0
        %301 = vmatprep.subr.bf16.mxu0 0
        %302 = vmatpush1.bf16.msra.mxu0 0
        %303 = vmatprep.subr.bf16.mxu0 0
        %304 = vmatpush1.bf16.msra.mxu0 0
        %305 = vmatprep.subr.bf16.mxu0 0
        %306 = vmatpush1.bf16.msra.mxu0 0
        %307 = vmatprep.subr.bf16.mxu0 0
        %308 = vmatpush1.bf16.msra.mxu0 0
        %309 = vmatprep.subr.bf16.mxu0 0
        %310 = vmatpush1.bf16.msra.mxu0 0
        %311 = vmatprep.mubr.bf16.mxu0 0
        %312 = vmatmul.mubr.bf16.gmra.mrb[0].mxu0 %v227
        %v313 = vpop.f32.mrb[0].mxu0
        %v314 = vadd.f32 0.0, %v313
        %v315 = vpop.f32.mrb[0].mxu0
        %v316 = vpop.f32.mrb[0].mxu0
        %v317 = vadd.f32 0.0, %v316
        %v318 = vpop.f32.mrb[0].mxu0
        %319 = vmatprep.mubr.bf16.mxu0 0
        %320 = vmatmul.mubr.bf16.gmra.mrb[0].mxu0 %v228
        %v321 = vpop.f32.mrb[0].mxu0
        %v322 = vadd.f32 0.0, %v321
        %v323 = vpop.f32.mrb[0].mxu0
        %v324 = vpop.f32.mrb[0].mxu0
        %v325 = vadd.f32 0.0, %v324
        %v326 = vpop.f32.mrb[0].mxu0
        %327 = vdwg.mxu0
        %vm328 = vcmp.gt.f32.partialorder %v314, 0.0
        %vm329 = vcmp.gt.f32.partialorder %v317, 0.0
        %vm330 = vcmp.gt.f32.partialorder %v322, 0.0
        %vm331 = vcmp.gt.f32.partialorder %v325, 0.0
        %v332 = vmul.f32 %v314, 0.2
        %v333 = vmul.f32 %v317, 0.2
        %v334 = vmul.f32 %v322, 0.2
        %v335 = vmul.f32 %v325, 0.2
        %v336 = vsel %vm328, %v314, %v332
        %v337 = vsel %vm329, %v317, %v333
        %v338 = vsel %vm330, %v322, %v334
        %v339 = vsel %vm331, %v325, %v335
        %v340 = vpack.c.bf16 %v337, %v336
        %v341 = vpack.c.bf16 %v339, %v338
        %v344 = vunpack.c.l.b16 %v340
        %v345 = vunpack.c.h.b16 %v340
        %v346 = vunpack.c.l.b16 %v341
        %v347 = vunpack.c.h.b16 %v341
        %v348 = vpack.c.b16 %v344, %v344
        %v349 = vpack.c.b16 %v345, %v345
        %v350 = vpack.c.b16 %v346, %v346
        %v351 = vpack.c.b16 %v347, %v347
        %356 = vst [vmem:[%s195] sm:$0xf] %v348
        %357 = vst [vmem:[%s195 + $0x4] sm:$0xf] %v349
        %358 = vst [vmem:[%s195 + $0x8] sm:$0xf] %v350
        %359 = vst [vmem:[%s195 + $0xc] sm:$0xf] %v351
        %s360 = sand.u32 %s91, 1
        %s361 = scalar_lea.sflag [#allocation4], %s360
        %s362 = sand.u32 %s91, 1
        %s363 = smul.addr %s362, 16
        %s364 = scalar_lea.vmem [#allocation7], %s363
        // Predicated region
        $region37: #{tpu_custom_call.1} parent=27 // pred_check
          %p365 = pneg %p101
        $region38: #{tpu_custom_call.1} parent=27 // pred_check_branch
          %367 = sbr.rel (%p365) target = $region40
        $region39: #{tpu_custom_call.1} parent=27 // pred_region
          %s368 = smul.u32 2, %s25
          %s370 = ssub.s32 256, 256
          %371 = vsyncadd %s361, %s370
          %s372 = smul.addr %s368, 2
          %s373 = smul.addr %s24, 32
          %s374 = sadd.s32 %s372, %s373
          %s375 = smul.addr %s374, 64
          %s376 = scalar_lea.hbm %s2, %s375
          %s377 = sshll.u32 %s364, 4
          %s378 = int_to_ptr.vmem [resolvable:$true] %s377
          %383 = dma.vmem_to_hbm [thread:$0]  %s378, 256, %s376, %s361, 64, 64, 4
        $region40: #{tpu_custom_call.1} parent=27 // pred_fallthru
          _
      $region28: #{tpu_custom_call.1} parent=5 // pred_fallthru
        _
      %p384 = scmp.le.s32.totalorder 2, %s15
      // Predicated region
      $region41: #{tpu_custom_call.1} parent=5 // pred_check
        %p385 = pneg %p384
      $region42: #{tpu_custom_call.1} parent=5 // pred_check_branch
        %387 = sbr.rel (%p385) target = $region44
      $region43: #{tpu_custom_call.1} parent=5 // pred_region
        %s388 = ssub.s32 %s15, 2
        // Predicated region
        $region45: #{tpu_custom_call.1} parent=43 // pred_check
          %p389 = pneg %p107
        $region46: #{tpu_custom_call.1} parent=43 // pred_check_branch
          %391 = sbr.rel (%p389) target = $region48
        $region47: #{tpu_custom_call.1} parent=43 // pred_region
          %s392 = sand.u32 %s92, 1
          %s393 = scalar_lea.sflag [#allocation4], %s392
          %s394 = sand.u32 %s92, 1
          %s395 = smul.addr %s394, 16
          %s396 = scalar_lea.vmem [#allocation7], %s395
          %397 = dma.done %s393, 256
        $region48: #{tpu_custom_call.1} parent=43 // pred_fallthru
          _
      $region44: #{tpu_custom_call.1} parent=5 // pred_fallthru
        _
    $region6: #{tpu_custom_call.1} parent=1 // loop_footer
      %s19 = sadd.s32 1, %s15
    $region7: #{tpu_custom_call.1} parent=1 // loop_footer_branch
      %14 = sbr.rel target = $region3
    $region8: #{tpu_custom_call.1} parent=1 // loop_exit
      _
    %398 = vsyncpa [#allocation3], 1
    %s399 = scalar_lea.sflag [#allocation3], 1
    %400 = vsyncpa %s399, 1
    %401 = vsyncpa [#allocation6], 1
    %402 = vsyncpa [#allocation4], 1
    %s403 = scalar_lea.sflag [#allocation4], 1
    %404 = vsyncpa %s403, 1

</llo_original>
